<compile_context>
chip_gen: v5e
topology: v5e:2x2
jax: 0.10.0
libtpu: 0.0.40
codegen_flags: <defaults>
</compile_context>

<pallas_src>
import functools

import jax
import jax.numpy as jnp
from jax import lax
from jax.experimental import pallas as pl
from jax.experimental.pallas import tpu as pltpu


def _nmse_kernel(x_ref, t_ref, out_ref, *acc_refs, power, block_rows, l_tile,
                 n_rows, n_cols, num_l_chunks, need_row_mask, need_lane_mask):
    i = pl.program_id(0)            # row-block index (parallel)
    j = pl.program_id(1)            # L-chunk index (trailing reduction axis)
    last_j = pl.num_programs(1) - 1

    x = x_ref[...]                  # (block_rows, l_tile), native dtype
    t = t_ref[...]

    # elementwise term: 2*sigmoid(p*|x-t|) - 1 == tanh(p*|x-t|/2)  (EUP op)
    d = jnp.abs(x.astype(jnp.float32) - t.astype(jnp.float32))
    loss0 = jnp.tanh((0.5 * power) * d)

    if need_lane_mask:
        # ragged last L-chunk: neutralize garbage lanes (0 for sum, +/-inf for
        # the extrema).  Compiled in only when L % l_tile != 0.
        lane = lax.broadcasted_iota(jnp.int32, (block_rows, l_tile), 1)
        lane_ok = (j * l_tile + lane) < n_cols
        lo = jnp.array(-jnp.inf, dtype=x.dtype)
        hi = jnp.array(jnp.inf, dtype=x.dtype)
        loss0 = jnp.where(lane_ok, loss0, 0.0)
        x_hi = jnp.where(lane_ok, x, lo)
        t_hi = jnp.where(lane_ok, t, lo)
        x_lo = jnp.where(lane_ok, x, hi)
        t_lo = jnp.where(lane_ok, t, hi)
    else:
        x_hi, t_hi, x_lo, t_lo = x, t, x, t

    # per-row (== per-(n,c) channel) chunk reductions; extrema in native dtype
    row_sum = jnp.sum(loss0, axis=-1, keepdims=True)                       # f32
    mx_x = jnp.max(x_hi, axis=-1, keepdims=True).astype(jnp.float32)
    mx_t = jnp.max(t_hi, axis=-1, keepdims=True).astype(jnp.float32)
    mn_x = jnp.min(x_lo, axis=-1, keepdims=True).astype(jnp.float32)
    mn_t = jnp.min(t_lo, axis=-1, keepdims=True).astype(jnp.float32)

    def _finalize(rs, mxx, mxt, mnx, mnt):
        dmax = jnp.abs(mxx - mxt)
        dmin = jnp.abs(mnx - mnt)
        if need_row_mask:
            # ragged last row-block: zero rows past the true row count so
            # garbage rows contribute nothing (diffs >= 0, so 0 never wins).
            row = lax.broadcasted_iota(jnp.int32, (block_rows, 1), 0)
            valid = (i * block_rows + row) < n_rows
            rs = jnp.where(valid, rs, 0.0)
            dmax = jnp.where(valid, dmax, 0.0)
            dmin = jnp.where(valid, dmin, 0.0)
        # lane-dense partial: lane 0 = sum, lane 1 = maxdiff, lane 2 = mindiff
        lane = lax.broadcasted_iota(jnp.int32, (8, 128), 1)
        vec = jnp.where(lane == 0, jnp.sum(rs),
                        jnp.where(lane == 1, jnp.max(dmax),
                                  jnp.where(lane == 2, jnp.max(dmin), 0.0)))
        out_ref[...] = vec[None].astype(out_ref.dtype)

    if num_l_chunks == 1:
        # common path: no scratch, no carried state
        _finalize(row_sum, mx_x, mx_t, mn_x, mn_t)
    else:
        sum_ref, maxx_ref, maxt_ref, minx_ref, mint_ref = acc_refs

        @pl.when(j == 0)
        def _():
            sum_ref[...] = row_sum
            maxx_ref[...] = mx_x
            maxt_ref[...] = mx_t
            minx_ref[...] = mn_x
            mint_ref[...] = mn_t

        @pl.when(j > 0)
        def _():
            sum_ref[...] = sum_ref[...] + row_sum
            maxx_ref[...] = jnp.maximum(maxx_ref[...], mx_x)
            maxt_ref[...] = jnp.maximum(maxt_ref[...], mx_t)
            minx_ref[...] = jnp.minimum(minx_ref[...], mn_x)
            mint_ref[...] = jnp.minimum(mint_ref[...], mn_t)

        @pl.when(j == last_j)
        def _():
            _finalize(sum_ref[...], maxx_ref[...], maxt_ref[...],
                      minx_ref[...], mint_ref[...])


def _pick_tiles(R, L, itemsize):
    """Generation-aware (block_rows, l_tile, vmem_limit) selection."""
    try:
        info = pltpu.get_tpu_info()
        vmem = int(getattr(info, "vmem_capacity_bytes", 64 << 20))
    except Exception:  # pragma: no cover - interpret mode / older jax
        vmem = 64 << 20
    vmem_limit = int(min(vmem * 3 // 4, 96 << 20))      # 48 MiB v7x, 96 MiB v5e/v6e
    work_budget = (vmem_limit * 3) // 5                  # ~60% of limit as headroom

    # per-element footprint: 2 inputs x 2 pipeline buffers (native dtype)
    # + ~3 tile-sized f32 temporaries (upcasts / |x-t| / tanh chain)
    per_elem = 4 * int(itemsize) + 12
    # per-row allowance for lane-padded per-row vectors / accumulators
    per_row = 4096

    # L (lane/reduction) tile: full L if an 8-row slab fits, else tile by 128s.
    max_l = max(128, (work_budget // 8 - per_row) // per_elem)
    l_tile = L if L <= max_l else max(128, (max_l // 128) * 128)

    # Row tile: fill the budget, but keep >= 4 row blocks when R allows it
    # (megacore sharding on v7x + double-buffer overlap).
    rows_fit = max(8, (work_budget // (l_tile * per_elem + per_row)) // 8 * 8)
    rows_quarter = max(8, ((-(-R // 4)) + 7) // 8 * 8)
    rows_full = ((R + 7) // 8) * 8
    block_rows = max(8, min(rows_fit, rows_quarter, rows_full))
    return int(block_rows), int(l_tile), vmem_limit


def nmse_pallas(inp, tgt, power=6, *, block_rows=None, l_tile=None):
    """inp, tgt: (N, C, H, W) arrays (NCHW, like PyTorch). Returns scalar loss."""
    assert inp.shape == tgt.shape and inp.ndim == 4
    N, C, H, W = inp.shape
    R, L = N * C, H * W
    total_count = float(N * C * H * W)

    # free reshape, native dtype streamed (no pad, no upcast copy)
    x2d = inp.reshape(R, L)
    t2d = tgt.reshape(R, L)

    itemsize = jnp.dtype(x2d.dtype).itemsize
    auto_rows, auto_l, vmem_limit = _pick_tiles(R, L, itemsize)
    if block_rows is None:
        block_rows = auto_rows
    if l_tile is None:
        l_tile = auto_l
    block_rows = max(8, (block_rows // 8) * 8)
    l_tile = min(int(l_tile), L)

    n_r = -(-R // block_rows)
    n_l = -(-L // l_tile)
    need_row_mask = (R % block_rows) != 0
    need_lane_mask = (n_l > 1) and (L % l_tile) != 0

    kernel = functools.partial(
        _nmse_kernel, power=float(power), block_rows=block_rows, l_tile=l_tile,
        n_rows=R, n_cols=L, num_l_chunks=n_l,
        need_row_mask=need_row_mask, need_lane_mask=need_lane_mask)

    scratch = []
    if n_l > 1:
        scratch = [pltpu.VMEM((block_rows, 1), jnp.float32) for _ in range(5)]

    partials = pl.pallas_call(
        kernel,
        out_shape=jax.ShapeDtypeStruct((n_r, 8, 128), jnp.float32),
        grid=(n_r, n_l),
        in_specs=[
            pl.BlockSpec((block_rows, l_tile), lambda i, j: (i, j)),
            pl.BlockSpec((block_rows, l_tile), lambda i, j: (i, j)),
        ],
        out_specs=pl.BlockSpec((1, 8, 128), lambda i, j: (i, 0, 0)),
        scratch_shapes=scratch,
        compiler_params=pltpu.CompilerParams(
            dimension_semantics=("parallel", "arbitrary"),
            vmem_limit_bytes=vmem_limit),
    )(x2d, t2d)

    # tiny final combine in the wrapper (also a more accurate partial-sum fold)
    return (partials[:, 0, 0].sum() / total_count
            + partials[:, 0, 1].max()
            + partials[:, 0, 2].max())


def nmse_ref(inp, tgt, power=6):
    """Pure-JAX reference matching the PyTorch forward (math in f32)."""
    inp = inp.astype(jnp.float32)
    tgt = tgt.astype(jnp.float32)
    loss0 = 2.0 / (jnp.exp(-power * jnp.abs(inp - tgt)) + 1.0) - 1.0
    max_i = jnp.max(inp, axis=(2, 3))
    max_t = jnp.max(tgt, axis=(2, 3))
    min_i = jnp.min(inp, axis=(2, 3))
    min_t = jnp.min(tgt, axis=(2, 3))
    return (jnp.mean(loss0)
            + jnp.max(jnp.abs(max_i - max_t))
            + jnp.max(jnp.abs(min_i - min_t)))


# TODO(synk): NMSE.crop() is an unused helper in the PyTorch module's forward
# path, so it is intentionally not implemented as a kernel.

if __name__ == "__main__":
    key = jax.random.PRNGKey(0)
    cases = [
        # main small case
        dict(shape=(2, 4, 16, 16), dtype=jnp.float32, kw={}),
        # ragged rows (N*C = 6) and sub-128 lane width (H*W = 49)
        dict(shape=(2, 3, 7, 7), dtype=jnp.float32, kw={}),
        # bf16 inputs, kernel math in f32
        dict(shape=(2, 4, 16, 16), dtype=jnp.bfloat16, kw={}),
        # forced L-tiling (l_tile=128, L=320): multi-chunk carry + both masks
        dict(shape=(2, 3, 16, 20), dtype=jnp.float32,
             kw=dict(block_rows=8, l_tile=128)),
    ]
    for idx, case in enumerate(cases):
        k1, k2 = jax.random.split(jax.random.fold_in(key, idx))
        a = jax.random.normal(k1, case["shape"], dtype=jnp.float32).astype(case["dtype"])
        b = jax.random.normal(k2, case["shape"], dtype=jnp.float32).astype(case["dtype"])
        out = jax.block_until_ready(nmse_pallas(a, b, power=6, **case["kw"]))
        ref = jax.block_until_ready(nmse_ref(a, b, power=6))
        assert jnp.allclose(out, ref, rtol=1e-4, atol=1e-4), (case["shape"], out, ref)
    print("KERNEL_OK")
</pallas_src>

<mosaic_0001>
module attributes {stable_mosaic.version = 11 : i64} {
  func.func @_nmse_kernel(%arg0: i32, %arg1: i32, %arg2: memref<8x256xf32, #tpu.memory_space<vmem>>, %arg3: memref<8x256xf32, #tpu.memory_space<vmem>>, %arg4: memref<1x8x128xf32, #tpu.memory_space<vmem>>) attributes {dimension_semantics = [#tpu.dimension_semantics<parallel>, #tpu.dimension_semantics<arbitrary>], iteration_bounds = array<i64: 1, 1>, scalar_prefetch = 0 : i64, scratch_operands = 0 : i64, tpu.core_type = #tpu.core_type<tc>, window_params = [{transform_indices = @transform_0, window_bounds = array<i64: 8, 256>}, {transform_indices = @transform_1, window_bounds = array<i64: 8, 256>}, {transform_indices = @transform_2, window_bounds = array<i64: 1, 8, 128>}]} {
    %c0 = arith.constant 0 : index
    %c0_0 = arith.constant 0 : index
    %0 = vector.load %arg2[%c0, %c0_0] : memref<8x256xf32, #tpu.memory_space<vmem>>, vector<8x256xf32>
    %c0_1 = arith.constant 0 : index
    %c0_2 = arith.constant 0 : index
    %1 = vector.load %arg3[%c0_1, %c0_2] : memref<8x256xf32, #tpu.memory_space<vmem>>, vector<8x256xf32>
    %2 = arith.subf %0, %1 : vector<8x256xf32>
    %3 = math.absf %2 : vector<8x256xf32>
    %cst = arith.constant 3.000000e+00 : f32
    %4 = vector.broadcast %cst : f32 to vector<8x256xf32>
    %5 = arith.mulf %4, %3 : vector<8x256xf32>
    %6 = math.tanh %5 : vector<8x256xf32>
    %cst_3 = arith.constant dense<0.000000e+00> : vector<8xf32>
    %7 = vector.multi_reduction <add>, %6, %cst_3 [1] : vector<8x256xf32> to vector<8xf32>
    %8 = vector.shape_cast %7 : vector<8xf32> to vector<8x1xf32>
    %cst_4 = arith.constant dense<0xFF800000> : vector<8xf32>
    %9 = vector.multi_reduction <maximumf>, %0, %cst_4 [1] : vector<8x256xf32> to vector<8xf32>
    %10 = vector.shape_cast %9 : vector<8xf32> to vector<8x1xf32>
    %cst_5 = arith.constant dense<0xFF800000> : vector<8xf32>
    %11 = vector.multi_reduction <maximumf>, %1, %cst_5 [1] : vector<8x256xf32> to vector<8xf32>
    %12 = vector.shape_cast %11 : vector<8xf32> to vector<8x1xf32>
    %cst_6 = arith.constant dense<0x7F800000> : vector<8xf32>
    %13 = vector.multi_reduction <minimumf>, %0, %cst_6 [1] : vector<8x256xf32> to vector<8xf32>
    %14 = vector.shape_cast %13 : vector<8xf32> to vector<8x1xf32>
    %cst_7 = arith.constant dense<0x7F800000> : vector<8xf32>
    %15 = vector.multi_reduction <minimumf>, %1, %cst_7 [1] : vector<8x256xf32> to vector<8xf32>
    %16 = vector.shape_cast %15 : vector<8xf32> to vector<8x1xf32>
    %17 = arith.subf %10, %12 : vector<8x1xf32>
    %18 = math.absf %17 : vector<8x1xf32>
    %19 = arith.subf %14, %16 : vector<8x1xf32>
    %20 = math.absf %19 : vector<8x1xf32>
    %21 = tpu.iota {dimensions = array<i32: 1>} : vector<8x128xi32>
    %c0_i32 = arith.constant 0 : i32
    %22 = vector.broadcast %c0_i32 : i32 to vector<8x128xi32>
    %23 = arith.cmpi eq, %21, %22 : vector<8x128xi32>
    %24 = vector.shape_cast %8 : vector<8x1xf32> to vector<1x8x1xf32>
    %cst_8 = arith.constant dense<0.000000e+00> : vector<1xf32>
    %25 = vector.multi_reduction <add>, %24, %cst_8 [1, 2] : vector<1x8x1xf32> to vector<1xf32>
    %26 = vector.shape_cast %25 : vector<1xf32> to vector<1x1x1xf32>
    %27 = vector.extract %26[0, 0, 0] : f32 from vector<1x1x1xf32>
    %c1_i32 = arith.constant 1 : i32
    %28 = vector.broadcast %c1_i32 : i32 to vector<8x128xi32>
    %29 = arith.cmpi eq, %21, %28 : vector<8x128xi32>
    %30 = vector.shape_cast %18 : vector<8x1xf32> to vector<1x8x1xf32>
    %cst_9 = arith.constant dense<0xFF800000> : vector<1xf32>
    %31 = vector.multi_reduction <maximumf>, %30, %cst_9 [1, 2] : vector<1x8x1xf32> to vector<1xf32>
    %32 = vector.shape_cast %31 : vector<1xf32> to vector<1x1x1xf32>
    %33 = vector.extract %32[0, 0, 0] : f32 from vector<1x1x1xf32>
    %c2_i32 = arith.constant 2 : i32
    %34 = vector.broadcast %c2_i32 : i32 to vector<8x128xi32>
    %35 = arith.cmpi eq, %21, %34 : vector<8x128xi32>
    %36 = vector.shape_cast %20 : vector<8x1xf32> to vector<1x8x1xf32>
    %cst_10 = arith.constant dense<0xFF800000> : vector<1xf32>
    %37 = vector.multi_reduction <maximumf>, %36, %cst_10 [1, 2] : vector<1x8x1xf32> to vector<1xf32>
    %38 = vector.shape_cast %37 : vector<1xf32> to vector<1x1x1xf32>
    %39 = vector.extract %38[0, 0, 0] : f32 from vector<1x1x1xf32>
    %cst_11 = arith.constant 0.000000e+00 : f32
    %40 = vector.broadcast %39 : f32 to vector<8x128xf32>
    %41 = vector.broadcast %cst_11 : f32 to vector<8x128xf32>
    %42 = arith.select %35, %40, %41 : vector<8x128xi1>, vector<8x128xf32>
    %43 = vector.broadcast %33 : f32 to vector<8x128xf32>
    %44 = arith.select %29, %43, %42 : vector<8x128xi1>, vector<8x128xf32>
    %45 = vector.broadcast %27 : f32 to vector<8x128xf32>
    %46 = arith.select %23, %45, %44 : vector<8x128xi1>, vector<8x128xf32>
    %47 = vector.shape_cast %46 : vector<8x128xf32> to vector<1x8x128xf32>
    %c0_12 = arith.constant 0 : index
    %c0_13 = arith.constant 0 : index
    %c0_14 = arith.constant 0 : index
    %48 = vector.load %arg4[%c0_12, %c0_13, %c0_14] : memref<1x8x128xf32, #tpu.memory_space<vmem>>, vector<1x8x128xf32>
    tpu.vector_store %arg4[%c0_12, %c0_13, %c0_14], %47 {strides = array<i32>} : memref<1x8x128xf32, #tpu.memory_space<vmem>>, vector<1x8x128xf32>,
    return
  }
  func.func @transform_0(%arg0: i32, %arg1: i32) -> (i32, i32) {
    %c0_i32 = arith.constant 0 : i32
    return %arg0, %arg1 : i32, i32
  }
  func.func @transform_1(%arg0: i32, %arg1: i32) -> (i32, i32) {
    %c0_i32 = arith.constant 0 : i32
    return %arg0, %arg1 : i32, i32
  }
  func.func @transform_2(%arg0: i32, %arg1: i32) -> (i32, i32, i32) {
    %c0_i32 = arith.constant 0 : i32
    %c0_i32_0 = arith.constant 0 : i32
    %c0_i32_1 = arith.constant 0 : i32
    return %arg0, %c0_i32, %c0_i32_0 : i32, i32, i32
  }
}

</mosaic_0001>

<llo_original>
// kernel: tpu_custom_call.1
$region0: #{tpu_custom_call.1}
  #allocation0 [shape = 'u32[]', space=smem, size = 0x4, offset = 0x4, fixed_abs, tag = 'smem constant byte address 0x4 - core index']
  #allocation1 [shape = 'u32[72,128]{1,0:T(1,128)}', space=vmem, size = 0x9000, scoped, tag = 'internal scratch']
  %s0 = inlined_call_operand.hbm [shape: f32[8,256], index: 0, kind: input, shape index: {}]
  %s1 = inlined_call_operand.hbm [shape: f32[8,256], index: 1, kind: input, shape index: {}]
  %s2 = inlined_call_operand.hbm [shape: f32[1,8,128], index: 2, kind: output, shape index: {}]
  %s3 = sld [smem:[#allocation0]]
  $region26: #{tpu_custom_call.1} parent=0
    _
  %s5 = ssub.s32 1, %s3
  %s6 = scalar_select 0, %s5, %s3
  $region1: #{tpu_custom_call.1} parent=0
    #allocation2 [shape = 'u8[8192]{0}', space=vmem, size = 0x2000, scoped, tag = 'input window, operand 0, single buffered']
    #allocation3 [shape = 's32[1]{0}', space=sflag, size = 0x4, scoped, tag = 'scoped memory for tpu_custom_call.1']
    #allocation4 [shape = 's32[1]{0}', space=sflag, size = 0x4, scoped, tag = 'scoped memory for tpu_custom_call.1']
    #allocation5 [shape = 'u8[8192]{0}', space=vmem, size = 0x2000, scoped, tag = 'input window, operand 1, single buffered']
    #allocation6 [shape = 's32[1]{0}', space=sflag, size = 0x4, scoped, tag = 'scoped memory for tpu_custom_call.1']
    #allocation7 [shape = 'u8[4096]{0}', space=vmem, size = 0x1000, scoped, tag = 'output window, operand 0, single buffered']
    %7 = vsyncpa [#allocation3], 0
    %8 = vsyncpa [#allocation6], 0
    %9 = vsyncpa [#allocation4], 0
    // Predicated region
    $region2: #{tpu_custom_call.1} parent=1 // pred_check
      _
    $region3: #{tpu_custom_call.1} parent=1 // pred_check_branch
      %11 = sbr.rel (0) target = $region5
    $region4: #{tpu_custom_call.1} parent=1 // pred_region
      %13 = vsyncadd [#allocation3], 0
      %s15 = sshll.u32 %s0, 4
      %s16 = int_to_ptr.hbm [resolvable:$true] %s15
      %s17 = sshll.u32 [#allocation2], 4
      %s18 = int_to_ptr.vmem [resolvable:$true] %s17
      %20 = dma.hbm_to_vmem [thread:$0]  %s16, 256, %s18, [#allocation3]
    $region5: #{tpu_custom_call.1} parent=1 // pred_fallthru
      _
    // Predicated region
    $region6: #{tpu_custom_call.1} parent=1 // pred_check
      _
    $region7: #{tpu_custom_call.1} parent=1 // pred_check_branch
      %22 = sbr.rel (0) target = $region9
    $region8: #{tpu_custom_call.1} parent=1 // pred_region
      %24 = vsyncadd [#allocation6], 0
      %s26 = sshll.u32 %s1, 4
      %s27 = int_to_ptr.hbm [resolvable:$true] %s26
      %s28 = sshll.u32 [#allocation5], 4
      %s29 = int_to_ptr.vmem [resolvable:$true] %s28
      %31 = dma.hbm_to_vmem [thread:$0]  %s27, 256, %s29, [#allocation6]
    $region9: #{tpu_custom_call.1} parent=1 // pred_fallthru
      _
    // Predicated region
    $region10: #{tpu_custom_call.1} parent=1 // pred_check
      _
    $region11: #{tpu_custom_call.1} parent=1 // pred_check_branch
      %33 = sbr.rel (0) target = $region13
    $region12: #{tpu_custom_call.1} parent=1 // pred_region
      %35 = dma.done [#allocation3], 256
    $region13: #{tpu_custom_call.1} parent=1 // pred_fallthru
      _
    // Predicated region
    $region14: #{tpu_custom_call.1} parent=1 // pred_check
      _
    $region15: #{tpu_custom_call.1} parent=1 // pred_check_branch
      %37 = sbr.rel (0) target = $region17
    $region16: #{tpu_custom_call.1} parent=1 // pred_region
      %39 = dma.done [#allocation6], 256
    $region17: #{tpu_custom_call.1} parent=1 // pred_fallthru
      _
    %v40 = vld [vmem:[#allocation2] sm:$0xff]
    %v41 = vld [vmem:[#allocation2 + $0x8] sm:$0xff]
    %v42 = vld [vmem:[#allocation5] sm:$0xff]
    %v43 = vld [vmem:[#allocation5 + $0x8] sm:$0xff]
    %v44 = vsub.f32 %v40, %v42
    %v45 = vsub.f32 %v41, %v43
    %v46 = vand.u32 2147483647, %v44
    %v47 = vand.u32 2147483647, %v45
    %v48 = vmul.f32 %v46, 3.0
    %v49 = vmul.f32 %v47, 3.0
    %v50 = vtanh.pop %v48
    %v51 = vtanh.pop %v49
    %v52 = vadd.f32 %v50, %v51
    %53 = vadd.xlane.f32.xlu0 %v52
    %v54 = vpop.xlane.xlu0 %53
    %v55 = vmax.f32 %v40, %v41
    %56 = vmax.xlane.f32.xlu0 %v55
    %v57 = vpop.xlane.xlu0 %56
    %v58 = vmax.f32 %v42, %v43
    %59 = vmax.xlane.f32.xlu0 %v58
    %v60 = vpop.xlane.xlu0 %59
    %v61 = vmin.f32 %v40, %v41
    %62 = vmin.xlane.f32.xlu0 %v61
    %v63 = vpop.xlane.xlu0 %62
    %v64 = vmin.f32 %v42, %v43
    %65 = vmin.xlane.f32.xlu0 %v64
    %v66 = vpop.xlane.xlu0 %65
    %v67 = vsub.f32 %v57, %v60
    %v68 = vand.u32 2147483647, %v67
    %v69 = vsub.f32 %v63, %v66
    %v70 = vand.u32 2147483647, %v69
    %v71 = vlaneseq
    %v72 = vand.u32 %v71, 127
    %vm73 = vcmp.eq.s32.totalorder %v72, 0
    %vm74 = vcmask 7168
    %v75 = vsel %vm74, %v54, 0.0
    %76 = vadd.xlane.f32.xlu0 %v75
    %v77 = vpop.xlane.xlu0 %76
    %v78 = vrot.slane %v77, 4
    %v79 = vadd.f32 %v77, %v78
    %v80 = vrot.slane %v79, 2
    %v81 = vadd.f32 %v79, %v80
    %v82 = vrot.slane %v81, 1
    %v83 = vadd.f32 %v81, %v82
    %s84 = vtos %v83
    %vm85 = vcmp.eq.s32.totalorder %v72, 1
    %v86 = vrot.slane %v68, 4
    %v87 = vmax.f32 %v68, %v86
    %v88 = vrot.slane %v87, 2
    %v89 = vmax.f32 %v87, %v88
    %v90 = vrot.slane %v89, 1
    %v91 = vmax.f32 %v89, %v90
    %s92 = vtos %v91
    %vm93 = vcmp.eq.s32.totalorder %v72, 2
    %v94 = vrot.slane %v70, 4
    %v95 = vmax.f32 %v70, %v94
    %v96 = vrot.slane %v95, 2
    %v97 = vmax.f32 %v95, %v96
    %v98 = vrot.slane %v97, 1
    %v99 = vmax.f32 %v97, %v98
    %s100 = vtos %v99
    %v101 = vstv %s100
    %v102 = vsel %vm93, %v101, 0.0
    %v103 = vstv %s92
    %v104 = vsel %vm85, %v103, %v102
    %v105 = vstv %s84
    %v106 = vsel %vm73, %v105, %v104
    %107 = vst [vmem:[#allocation7] sm:$0xff] %v106
    // Predicated region
    $region18: #{tpu_custom_call.1} parent=1 // pred_check
      _
    $region19: #{tpu_custom_call.1} parent=1 // pred_check_branch
      %109 = sbr.rel (0) target = $region21
    $region20: #{tpu_custom_call.1} parent=1 // pred_region
      %111 = vsyncadd [#allocation4], 0
      %s113 = sshll.u32 [#allocation7], 4
      %s114 = int_to_ptr.vmem [resolvable:$true] %s113
      %s115 = sshll.u32 %s2, 4
      %s116 = int_to_ptr.hbm [resolvable:$true] %s115
      %118 = dma.vmem_to_hbm [thread:$0]  %s114, 128, %s116, [#allocation4]
    $region21: #{tpu_custom_call.1} parent=1 // pred_fallthru
      _
    // Predicated region
    $region22: #{tpu_custom_call.1} parent=1 // pred_check
      _
    $region23: #{tpu_custom_call.1} parent=1 // pred_check_branch
      %120 = sbr.rel (0) target = $region25
    $region24: #{tpu_custom_call.1} parent=1 // pred_region
      %122 = dma.done [#allocation4], 128
    $region25: #{tpu_custom_call.1} parent=1 // pred_fallthru
      _
    %123 = vsyncpa [#allocation3], 1
    %124 = vsyncpa [#allocation6], 1
    %125 = vsyncpa [#allocation4], 1

</llo_original>
